<compile_context>
chip_gen: v6e
topology: v6e:2x2x1
jax: 0.10.0
libtpu: 0.0.40
codegen_flags: <defaults>
</compile_context>

<pallas_src>
import functools
import warnings

import jax
import jax.numpy as jnp
from jax.experimental import pallas as pl
from jax.experimental.pallas import tpu as pltpu

_LANE = 128
_SUBLANE = 8


def _round_up(a, b):
    return ((a + b - 1) // b) * b


def _cdiv(a, b):
    return -(-a // b)


class _ChipConfig:
    """Per-generation tuning knobs (best effort; conservative defaults)."""

    def __init__(self, vmem_cap, num_tc, mxu_dim, default_block_rows):
        self.vmem_cap = vmem_cap                  # scoped-VMEM request ceiling
        self.num_tc = num_tc                      # TensorCores sharing the grid
        self.mxu_dim = mxu_dim                    # systolic array width
        self.default_block_rows = default_block_rows


def _chip_config():
    kind = ""
    try:
        kind = jax.devices()[0].device_kind.lower()
    except Exception:  # no device info available; fall through to defaults
        pass
    if "v5" in kind and ("lite" in kind or "5e" in kind):
        # v5e: 1 TC, 128 MiB VMEM, 128x128 MXU -> big single tiles
        return _ChipConfig(100 << 20, 1, 128, 512)
    if "v6" in kind:
        # v6e: 1 TC, 128 MiB VMEM, 256x256 MXU
        return _ChipConfig(100 << 20, 1, 256, 512)
    if "v3" in kind or "v4" in kind or "v5" in kind:
        # other generations: moderate, safe settings
        return _ChipConfig(64 << 20, 2, 128, 256)
    # v7x (and unknown): 2 TCs/chip, 64 MiB VMEM/TC, 256x256 MXU.
    # Cap below 64 MiB to leave room for Mosaic internal scratch.
    return _ChipConfig(52 << 20, 2, 256, 256)


def _pad_feature(d, mxu_dim):
    # Lane-dense padding: at least a multiple of 128; use the full MXU width
    # (256 on v6e/v7x) for feature dims that already exceed one 128-lane vreg.
    # Zero padding is exact for relu / tanh / identity.
    p = _round_up(d, _LANE)
    if p > _LANE and mxu_dim > _LANE:
        p = _round_up(d, mxu_dim)
    return p


def _apply_activation(name, x):
    if name == "relu":
        return jnp.maximum(x, 0.0)
    if name == "tanh":
        return jnp.tanh(x)
    if name in ("identity", "linear", None):
        return x
    raise ValueError(f"unsupported activation: {name}")


def _ffn_kernel(x_ref, *refs, activations, compute_dtype, fast_tanh):
    """Fused multi-layer feed-forward.

    refs = (w1, b1, w2, b2, ..., wL, bL, out_ref)
    Each layer: h = act(h @ W + b); dropout is identity (eval mode).
    Matmuls: bf16 operands, f32 accumulation.  Bias/activation math in f32,
    then the intermediate is cast straight back to bf16 (its only consumer is
    the next bf16 matmul); the final layer stays f32 until the store cast.
    """
    out_ref = refs[-1]
    param_refs = refs[:-1]
    num_layers = len(param_refs) // 2

    h = x_ref[...].astype(compute_dtype)          # bf16 MXU operand, no f32 trip
    for l in range(num_layers):
        w = param_refs[2 * l][...]                           # bf16 (in_p, out_p)
        b = param_refs[2 * l + 1][...].astype(jnp.float32)   # (1, out_p)
        z = jnp.dot(h, w, preferred_element_type=jnp.float32) + b
        act = activations[l]
        if l == num_layers - 1:
            h = _apply_activation(act, z)                    # f32 until store
        elif act == "tanh" and fast_tanh:
            # bf16 EUP tanh (v6e/v7x); result is bf16-bound for the next matmul.
            h = jnp.tanh(z.astype(compute_dtype))
        else:
            h = _apply_activation(act, z).astype(compute_dtype)
        # dropout(p) in eval mode == identity
    out_ref[...] = h.astype(out_ref.dtype)


def feed_forward(x, weights, biases, activations, *,
                 block_rows=None, compute_dtype=jnp.bfloat16, output_dtype=None):
    """Runs the fused FeedForward Pallas kernel.

    x:       (N, input_dim)
    weights: list of (in_l, out_l) arrays (transposed vs torch's (out, in))
    biases:  list of (out_l,) arrays
    activations: list of activation names ("relu" / "tanh" / "identity")
    output_dtype: optional (e.g. jnp.bfloat16) to halve output writeback DMA.
    """
    n, d_in = x.shape
    num_layers = len(weights)
    assert len(biases) == num_layers and len(activations) == num_layers
    output_dtype = jnp.dtype(output_dtype if output_dtype is not None else x.dtype)

    cfg = _chip_config()

    # ---- feature padding (lane/MXU-dense) ---------------------------------
    d_in_p = _pad_feature(d_in, cfg.mxu_dim)
    out_dims = [w.shape[1] for w in weights]
    out_dims_p = [_pad_feature(d, cfg.mxu_dim) for d in out_dims]
    in_dims_p = [d_in_p] + out_dims_p[:-1]
    widest = max([d_in_p] + out_dims_p)
    out_dim, out_dim_p = out_dims[-1], out_dims_p[-1]

    weights_p, biases_p = [], []
    for w, b, ip, op in zip(weights, biases, in_dims_p, out_dims_p):
        wp = jnp.pad(w, ((0, ip - w.shape[0]), (0, op - w.shape[1])))
        weights_p.append(wp.astype(compute_dtype))            # bf16 MXU operands
        bp = jnp.pad(b, (0, op - b.shape[0])).reshape(1, -1).astype(jnp.float32)
        biases_p.append(bp)
    param_bytes = sum(int(a.size) * a.dtype.itemsize
                      for a in weights_p + biases_p)
    # TODO(synk): if param_bytes exceeds the per-TC VMEM budget (~40 MiB on v7x),
    # block the widest layer along N/K (256-multiples) with an inner
    # pltpu.emit_pipeline instead of keeping every weight fully resident.

    # ---- batch tiling ------------------------------------------------------
    x_bytes = x.dtype.itemsize
    out_bytes = output_dtype.itemsize
    rows = block_rows if block_rows is not None else cfg.default_block_rows
    rows = max(_SUBLANE, min(_round_up(int(rows), _SUBLANE),
                             _round_up(n, _SUBLANE)))
    # Clamp so resident params (counted once: single-buffered) + double-buffered
    # streamed x/out tiles + the f32+bf16 intermediate fit under the VMEM cap.
    per_row = 2 * d_in_p * x_bytes + 2 * out_dim_p * out_bytes + widest * 6
    avail = cfg.vmem_cap - param_bytes - (6 << 20)   # Mosaic scratch headroom
    if avail > 0:
        rows = min(rows, max(_SUBLANE, (avail // per_row) // _SUBLANE * _SUBLANE))
    # Even number of grid steps only when 2 TensorCores share the parallel
    # batch axis (v7x); single-TC chips keep one big tile for small batches.
    if cfg.num_tc > 1 and n > _SUBLANE:
        steps = _cdiv(n, rows)
        if steps % cfg.num_tc != 0:
            rows = _round_up(_cdiv(n, _round_up(steps, cfg.num_tc)), _SUBLANE)
    block_rows = rows
    n_pad = _round_up(n, block_rows)
    grid = (n_pad // block_rows,)

    x_p = jnp.pad(x, ((0, n_pad - n), (0, d_in_p - d_in)))

    # ---- VMEM budget & cost estimate (params counted once) -----------------
    needed = (param_bytes
              + 2 * block_rows * d_in_p * x_bytes
              + 2 * block_rows * out_dim_p * out_bytes
              + block_rows * widest * 6
              + (6 << 20))
    vmem_limit = int(min(cfg.vmem_cap, max(32 << 20, needed)))

    flops = 2 * n_pad * sum(ip * op for ip, op in zip(in_dims_p, out_dims_p))
    transcendentals = sum(n_pad * op for op, a in zip(out_dims_p, activations)
                          if a == "tanh")
    bytes_accessed = (int(x_p.size) * x_bytes + param_bytes
                      + n_pad * out_dim_p * out_bytes)

    kernel = functools.partial(_ffn_kernel,
                               activations=tuple(activations),
                               compute_dtype=compute_dtype,
                               fast_tanh=(cfg.mxu_dim > 128))

    def _run(weight_pipeline_mode):
        # TODO(synk): if xprof shows exposed DMA on the streaming x/out tiles on
        # v7x, raise their pipeline depth to pl.Buffered(3) while keeping
        # weights single-buffered.
        in_specs = [pl.BlockSpec((block_rows, d_in_p), lambda i: (i, 0))]
        args = [x_p]
        for wp, bp in zip(weights_p, biases_p):
            # Weight/bias block index never changes across grid steps; with
            # Buffered(1) each parameter is fetched once and kept resident.
            if weight_pipeline_mode is None:
                in_specs.append(pl.BlockSpec(wp.shape, lambda i: (0, 0)))
                in_specs.append(pl.BlockSpec(bp.shape, lambda i: (0, 0)))
            else:
                in_specs.append(pl.BlockSpec(wp.shape, lambda i: (0, 0),
                                             pipeline_mode=weight_pipeline_mode))
                in_specs.append(pl.BlockSpec(bp.shape, lambda i: (0, 0),
                                             pipeline_mode=weight_pipeline_mode))
            args.append(wp)
            args.append(bp)
        return pl.pallas_call(
            kernel,
            out_shape=jax.ShapeDtypeStruct((n_pad, out_dim_p), output_dtype),
            grid=grid,
            in_specs=in_specs,
            out_specs=pl.BlockSpec((block_rows, out_dim_p), lambda i: (i, 0)),
            compiler_params=pltpu.CompilerParams(
                dimension_semantics=("parallel",),
                vmem_limit_bytes=vmem_limit),
            cost_estimate=pl.CostEstimate(flops=flops,
                                          transcendentals=transcendentals,
                                          bytes_accessed=bytes_accessed),
        )(*args)

    try:
        # Single-buffer the constant weight/bias blocks (halves their VMEM).
        out_p = _run(pl.Buffered(1))
    except (pltpu.LoweringException, TypeError, ValueError,
            NotImplementedError) as e:
        warnings.warn(
            "FeedForward Pallas kernel: single-buffered weight blocks rejected "
            f"({type(e).__name__}: {e}); falling back to default "
            "double-buffering.")
        out_p = _run(None)

    return out_p[:n, :out_dim]


def init_params(key, input_dim, hidden_dims):
    """Deterministic init mimicking nn.Linear's uniform(-1/sqrt(fan_in), ...)."""
    input_dims = [input_dim] + hidden_dims[:-1]
    weights, biases = [], []
    for d_in, d_out in zip(input_dims, hidden_dims):
        key, kw, kb = jax.random.split(key, 3)
        bound = 1.0 / (d_in ** 0.5)
        # stored as (in, out) = transpose of torch's (out, in)
        w = jax.random.uniform(kw, (d_in, d_out), jnp.float32, -bound, bound)
        b = jax.random.uniform(kb, (d_out,), jnp.float32, -bound, bound)
        weights.append(w)
        biases.append(b)
    return weights, biases


if __name__ == "__main__":
    key = jax.random.PRNGKey(0)

    # FeedForward(input_dim=32, num_layers=2, hidden_dims=[64, 32],
    #             activations=[relu, tanh], dropout=0.0) in eval mode.
    batch = 64
    input_dim = 32
    hidden_dims = [64, 32]
    activations = ["relu", "tanh"]

    key, kx = jax.random.split(key)
    x = jax.random.normal(kx, (batch, input_dim), jnp.float32)
    weights, biases = init_params(key, input_dim, hidden_dims)

    out = feed_forward(x, weights, biases, activations)
    out = jax.block_until_ready(out)
    assert out.shape == (batch, hidden_dims[-1])

    # Pure-JAX reference mirroring the kernel numerics (bf16 MXU operands,
    # f32 accumulation/bias/activation, bf16 inter-layer cast, eval dropout).
    ref = x.astype(jnp.bfloat16)
    for l, (w, b, act) in enumerate(zip(weights, biases, activations)):
        z = jnp.dot(ref, w.astype(jnp.bfloat16),
                    preferred_element_type=jnp.float32) + b
        z = _apply_activation(act, z)
        ref = z if l == len(weights) - 1 else z.astype(jnp.bfloat16)
    err = float(jnp.max(jnp.abs(out - ref)))
    assert jnp.allclose(out, ref, atol=2e-3, rtol=2e-3), f"max abs err: {err}"

    print("KERNEL_OK")
</pallas_src>

<mosaic_0001>
module attributes {stable_mosaic.version = 11 : i64} {
  func.func @_ffn_kernel(%arg0: i32, %arg1: memref<32x128xf32, #tpu.memory_space<vmem>>, %arg2: memref<128x128xbf16, #tpu.memory_space<vmem>>, %arg3: memref<1x128xf32, #tpu.memory_space<vmem>>, %arg4: memref<128x128xbf16, #tpu.memory_space<vmem>>, %arg5: memref<1x128xf32, #tpu.memory_space<vmem>>, %arg6: memref<32x128xf32, #tpu.memory_space<vmem>>) attributes {dimension_semantics = [#tpu.dimension_semantics<parallel>], iteration_bounds = array<i64: 2>, scalar_prefetch = 0 : i64, scratch_operands = 0 : i64, tpu.core_type = #tpu.core_type<tc>, window_params = [{transform_indices = @transform_0, window_bounds = array<i64: 32, 128>}, {pipeline_mode = #tpu.pipeline_mode<synchronous>, transform_indices = @transform_1, window_bounds = array<i64: 128, 128>}, {pipeline_mode = #tpu.pipeline_mode<synchronous>, transform_indices = @transform_2, window_bounds = array<i64: 1, 128>}, {pipeline_mode = #tpu.pipeline_mode<synchronous>, transform_indices = @transform_3, window_bounds = array<i64: 128, 128>}, {pipeline_mode = #tpu.pipeline_mode<synchronous>, transform_indices = @transform_4, window_bounds = array<i64: 1, 128>}, {transform_indices = @transform_5, window_bounds = array<i64: 32, 128>}]} {
    %c0 = arith.constant 0 : index
    %c0_0 = arith.constant 0 : index
    %0 = vector.load %arg1[%c0, %c0_0] : memref<32x128xf32, #tpu.memory_space<vmem>>, vector<32x128xf32>
    %1 = arith.truncf %0 : vector<32x128xf32> to vector<32x128xbf16>
    %c0_1 = arith.constant 0 : index
    %c0_2 = arith.constant 0 : index
    %2 = vector.load %arg2[%c0_1, %c0_2] : memref<128x128xbf16, #tpu.memory_space<vmem>>, vector<128x128xbf16>
    %c0_3 = arith.constant 0 : index
    %c0_4 = arith.constant 0 : index
    %3 = vector.load %arg3[%c0_3, %c0_4] : memref<1x128xf32, #tpu.memory_space<vmem>>, vector<1x128xf32>
    %cst = arith.constant dense<0.000000e+00> : vector<32x128xf32>
    %4 = tpu.matmul %1, %2, %cst {dimension_numbers = #tpu.dot_dimension_numbers<[1], [0], [0], [1], [0, 0, 1, 1], [], []>} : vector<32x128xbf16>, vector<128x128xbf16>, vector<32x128xf32> -> vector<32x128xf32>
    %5 = vector.broadcast %3 : vector<1x128xf32> to vector<32x128xf32>
    %6 = arith.addf %4, %5 : vector<32x128xf32>
    %cst_5 = arith.constant 0.000000e+00 : f32
    %7 = vector.broadcast %cst_5 : f32 to vector<32x128xf32>
    %8 = arith.maximumf %6, %7 : vector<32x128xf32>
    %9 = arith.truncf %8 : vector<32x128xf32> to vector<32x128xbf16>
    %c0_6 = arith.constant 0 : index
    %c0_7 = arith.constant 0 : index
    %10 = vector.load %arg4[%c0_6, %c0_7] : memref<128x128xbf16, #tpu.memory_space<vmem>>, vector<128x128xbf16>
    %c0_8 = arith.constant 0 : index
    %c0_9 = arith.constant 0 : index
    %11 = vector.load %arg5[%c0_8, %c0_9] : memref<1x128xf32, #tpu.memory_space<vmem>>, vector<1x128xf32>
    %cst_10 = arith.constant dense<0.000000e+00> : vector<32x128xf32>
    %12 = tpu.matmul %9, %10, %cst_10 {dimension_numbers = #tpu.dot_dimension_numbers<[1], [0], [0], [1], [0, 0, 1, 1], [], []>} : vector<32x128xbf16>, vector<128x128xbf16>, vector<32x128xf32> -> vector<32x128xf32>
    %13 = vector.broadcast %11 : vector<1x128xf32> to vector<32x128xf32>
    %14 = arith.addf %12, %13 : vector<32x128xf32>
    %15 = math.tanh %14 : vector<32x128xf32>
    %c0_11 = arith.constant 0 : index
    %c0_12 = arith.constant 0 : index
    %16 = vector.load %arg6[%c0_11, %c0_12] : memref<32x128xf32, #tpu.memory_space<vmem>>, vector<32x128xf32>
    tpu.vector_store %arg6[%c0_11, %c0_12], %15 {strides = array<i32>} : memref<32x128xf32, #tpu.memory_space<vmem>>, vector<32x128xf32>,
    return
  }
  func.func @transform_0(%arg0: i32) -> (i32, i32) {
    %c0_i32 = arith.constant 0 : i32
    %c0_i32_0 = arith.constant 0 : i32
    return %arg0, %c0_i32 : i32, i32
  }
  func.func @transform_1(%arg0: i32) -> (i32, i32) {
    %c0_i32 = arith.constant 0 : i32
    %c0_i32_0 = arith.constant 0 : i32
    %c0_i32_1 = arith.constant 0 : i32
    return %c0_i32, %c0_i32_0 : i32, i32
  }
  func.func @transform_2(%arg0: i32) -> (i32, i32) {
    %c0_i32 = arith.constant 0 : i32
    %c0_i32_0 = arith.constant 0 : i32
    %c0_i32_1 = arith.constant 0 : i32
    return %c0_i32, %c0_i32_0 : i32, i32
  }
  func.func @transform_3(%arg0: i32) -> (i32, i32) {
    %c0_i32 = arith.constant 0 : i32
    %c0_i32_0 = arith.constant 0 : i32
    %c0_i32_1 = arith.constant 0 : i32
    return %c0_i32, %c0_i32_0 : i32, i32
  }
  func.func @transform_4(%arg0: i32) -> (i32, i32) {
    %c0_i32 = arith.constant 0 : i32
    %c0_i32_0 = arith.constant 0 : i32
    %c0_i32_1 = arith.constant 0 : i32
    return %c0_i32, %c0_i32_0 : i32, i32
  }
  func.func @transform_5(%arg0: i32) -> (i32, i32) {
    %c0_i32 = arith.constant 0 : i32
    %c0_i32_0 = arith.constant 0 : i32
    return %arg0, %c0_i32 : i32, i32
  }
}

</mosaic_0001>

<llo_original>
// kernel: tpu_custom_call.1
$region0: #{tpu_custom_call.1}
  #allocation0 [shape = 'u32[]', space=smem, size = 0x4, offset = 0x4, fixed_abs, tag = 'smem constant byte address 0x4 - core index']
  #allocation1 [shape = 'u32[144,128]{1,0:T(1,128)}', space=vmem, size = 0x12000, scoped, tag = 'internal scratch']
  %s0 = inlined_call_operand.hbm [shape: f32[64,128], index: 0, kind: input, shape index: {}]
  %s1 = inlined_call_operand.hbm [shape: bf16[128,128], index: 1, kind: input, shape index: {}]
  %s2 = inlined_call_operand.vmem [shape: f32[1,128], index: 2, kind: input, shape index: {}]
  %s3 = inlined_call_operand.hbm [shape: bf16[128,128], index: 3, kind: input, shape index: {}]
  %s4 = inlined_call_operand.vmem [shape: f32[1,128], index: 4, kind: input, shape index: {}]
  %s5 = inlined_call_operand.hbm [shape: f32[64,128], index: 5, kind: output, shape index: {}]
  %s6 = sld [smem:[#allocation0]]
  $region65: #{tpu_custom_call.1} parent=0
    _
  %s8 = ssub.s32 1, %s6
  %s9 = scalar_select 0, %s8, %s6
  $region1: #{tpu_custom_call.1} parent=0
    #allocation2 [shape = 'u8[32768]{0}', space=vmem, size = 0x8000, scoped, tag = 'input window, operand 0']
    #allocation3 [shape = 's32[2]{0}', space=sflag, size = 0x8, scoped, tag = 'scoped memory for tpu_custom_call.1']
    #allocation4 [shape = 's32[2]{0}', space=sflag, size = 0x8, scoped, tag = 'scoped memory for tpu_custom_call.1']
    #allocation5 [shape = 'u8[32768]{0}', space=vmem, size = 0x8000, scoped, tag = 'input window, operand 1, single buffered']
    #allocation6 [shape = 's32[1]{0}', space=sflag, size = 0x4, scoped, tag = 'scoped memory for tpu_custom_call.1']
    #allocation7 [shape = 'u8[32768]{0}', space=vmem, size = 0x8000, scoped, tag = 'input window, operand 3, single buffered']
    #allocation8 [shape = 'u8[32768]{0}', space=vmem, size = 0x8000, scoped, tag = 'output window, operand 0']
    %10 = vsyncpa [#allocation3], 0
    %s11 = scalar_lea.sflag [#allocation3], 1
    %12 = vsyncpa %s11, 0
    %13 = vsyncpa [#allocation6], 0
    %14 = vsyncpa [#allocation4], 0
    %s15 = scalar_lea.sflag [#allocation4], 1
    %16 = vsyncpa %s15, 0
    loop: start=0, step=1, limit=4
    $region2: #{tpu_custom_call.1} parent=1 // loop_pre_header
      _
    $region3: #{tpu_custom_call.1} parent=1 // loop_header
      %s18 = sphi 0, %s22
      %p19 = scmp.ge.s32.totalorder %s18, 4
      %s28 = sphi 0, %s30
      %s31 = sphi 0, %s28
      %s32 = sphi 0, %s31
      %s48 = sphi 0, %s32
      %s52 = sphi 0, %s52
      %s54 = sphi 0, %s52
      %s55 = sphi 0, %s54
      %s69 = sphi 0, %s55
      %s73 = sphi 0, %s73
      %s75 = sphi 0, %s73
      %s76 = sphi 0, %s75
      %s90 = sphi 0, %s76
      %s94 = sphi 0, %s94
      %s96 = sphi 0, %s94
      %s97 = sphi 0, %s96
      %s111 = sphi 0, %s97
      %s115 = sphi 0, %s115
      %s117 = sphi 0, %s115
      %s118 = sphi 0, %s117
      %s132 = sphi 0, %s118
      %s138 = sphi 0, %s140
      %s141 = sphi 0, %s138
      %s142 = sphi 0, %s141
      %s158 = sphi 0, %s142
    $region4: #{tpu_custom_call.1} parent=1 // loop_header_branch
      %21 = sbr.rel (%p19) target = $region8
    $region5: #{tpu_custom_call.1} parent=1 // loop_body
      %s23 = ssub.s32 %s18, 1
      %s24 = ssub.s32 %s18, 2
      %s25 = sadd.s32 %s18, 1
      %s26 = ssub.s32 %s18, %s25
      %p27 = scmp.eq.s32.totalorder %s26, 0
      %s29 = sadd.s32 %s28, 1
      %s30 = scalar_select %p27, %s28, %s29
      %p33 = pneg %p27
      %p34 = scmp.eq.s32.totalorder %s18, 1
      %p35 = por %p33, %p34
      %p36 = scmp.ne.s32.totalorder %s28, %s31
      %p37 = scmp.eq.s32.totalorder %s18, 0
      %p38 = por %p36, %p37
      %p39 = scmp.ne.s32.totalorder %s28, %s31
      %p40 = scmp.eq.s32.totalorder %s23, 1
      %p41 = por %p39, %p40
      %p42 = scmp.ne.s32.totalorder %s31, %s32
      %p43 = scmp.eq.s32.totalorder %s23, 0
      %p44 = por %p42, %p43
      %p45 = scmp.ne.s32.totalorder %s31, %s32
      %p46 = scmp.eq.s32.totalorder %s24, 1
      %p47 = por %p45, %p46
      %p49 = scmp.ne.s32.totalorder %s32, %s48
      %p50 = scmp.eq.s32.totalorder %s24, 0
      %p51 = por %p49, %p50
      %s53 = sadd.s32 %s52, 1
      %p56 = scmp.eq.s32.totalorder %s18, 1
      %p57 = scmp.ne.s32.totalorder %s52, %s54
      %p58 = scmp.eq.s32.totalorder %s18, 0
      %p59 = por %p57, %p58
      %p60 = scmp.ne.s32.totalorder %s52, %s54
      %p61 = scmp.eq.s32.totalorder %s23, 1
      %p62 = por %p60, %p61
      %p63 = scmp.ne.s32.totalorder %s54, %s55
      %p64 = scmp.eq.s32.totalorder %s23, 0
      %p65 = por %p63, %p64
      %p66 = scmp.ne.s32.totalorder %s54, %s55
      %p67 = scmp.eq.s32.totalorder %s24, 1
      %p68 = por %p66, %p67
      %p70 = scmp.ne.s32.totalorder %s55, %s69
      %p71 = scmp.eq.s32.totalorder %s24, 0
      %p72 = por %p70, %p71
      %s74 = sadd.s32 %s73, 1
      %p77 = scmp.eq.s32.totalorder %s18, 1
      %p78 = scmp.ne.s32.totalorder %s73, %s75
      %p79 = scmp.eq.s32.totalorder %s18, 0
      %p80 = por %p78, %p79
      %p81 = scmp.ne.s32.totalorder %s73, %s75
      %p82 = scmp.eq.s32.totalorder %s23, 1
      %p83 = por %p81, %p82
      %p84 = scmp.ne.s32.totalorder %s75, %s76
      %p85 = scmp.eq.s32.totalorder %s23, 0
      %p86 = por %p84, %p85
      %p87 = scmp.ne.s32.totalorder %s75, %s76
      %p88 = scmp.eq.s32.totalorder %s24, 1
      %p89 = por %p87, %p88
      %p91 = scmp.ne.s32.totalorder %s76, %s90
      %p92 = scmp.eq.s32.totalorder %s24, 0
      %p93 = por %p91, %p92
      %s95 = sadd.s32 %s94, 1
      %p98 = scmp.eq.s32.totalorder %s18, 1
      %p99 = scmp.ne.s32.totalorder %s94, %s96
      %p100 = scmp.eq.s32.totalorder %s18, 0
      %p101 = por %p99, %p100
      %p102 = scmp.ne.s32.totalorder %s94, %s96
      %p103 = scmp.eq.s32.totalorder %s23, 1
      %p104 = por %p102, %p103
      %p105 = scmp.ne.s32.totalorder %s96, %s97
      %p106 = scmp.eq.s32.totalorder %s23, 0
      %p107 = por %p105, %p106
      %p108 = scmp.ne.s32.totalorder %s96, %s97
      %p109 = scmp.eq.s32.totalorder %s24, 1
      %p110 = por %p108, %p109
      %p112 = scmp.ne.s32.totalorder %s97, %s111
      %p113 = scmp.eq.s32.totalorder %s24, 0
      %p114 = por %p112, %p113
      %s116 = sadd.s32 %s115, 1
      %p119 = scmp.eq.s32.totalorder %s18, 1
      %p120 = scmp.ne.s32.totalorder %s115, %s117
      %p121 = scmp.eq.s32.totalorder %s18, 0
      %p122 = por %p120, %p121
      %p123 = scmp.ne.s32.totalorder %s115, %s117
      %p124 = scmp.eq.s32.totalorder %s23, 1
      %p125 = por %p123, %p124
      %p126 = scmp.ne.s32.totalorder %s117, %s118
      %p127 = scmp.eq.s32.totalorder %s23, 0
      %p128 = por %p126, %p127
      %p129 = scmp.ne.s32.totalorder %s117, %s118
      %p130 = scmp.eq.s32.totalorder %s24, 1
      %p131 = por %p129, %p130
      %p133 = scmp.ne.s32.totalorder %s118, %s132
      %p134 = scmp.eq.s32.totalorder %s24, 0
      %p135 = por %p133, %p134
      %s136 = ssub.s32 %s18, %s25
      %p137 = scmp.eq.s32.totalorder %s136, 0
      %s139 = sadd.s32 %s138, 1
      %s140 = scalar_select %p137, %s138, %s139
      %p143 = pneg %p137
      %p144 = scmp.eq.s32.totalorder %s18, 1
      %p145 = por %p143, %p144
      %p146 = scmp.ne.s32.totalorder %s138, %s141
      %p147 = scmp.eq.s32.totalorder %s18, 0
      %p148 = por %p146, %p147
      %p149 = scmp.ne.s32.totalorder %s138, %s141
      %p150 = scmp.eq.s32.totalorder %s23, 1
      %p151 = por %p149, %p150
      %p152 = scmp.ne.s32.totalorder %s141, %s142
      %p153 = scmp.eq.s32.totalorder %s23, 0
      %p154 = por %p152, %p153
      %p155 = scmp.ne.s32.totalorder %s141, %s142
      %p156 = scmp.eq.s32.totalorder %s24, 1
      %p157 = por %p155, %p156
      %p159 = scmp.ne.s32.totalorder %s142, %s158
      %p160 = scmp.eq.s32.totalorder %s24, 0
      %p161 = por %p159, %p160
      %p162 = scmp.le.s32.totalorder 1, %s18
      %p163 = scmp.lt.s32.totalorder %s18, 3
      %p164 = pnand %p162, %p163
      %p165 = pneg %p164
      // Predicated region
      $region9: #{tpu_custom_call.1} parent=5 // pred_check
        _
      $region10: #{tpu_custom_call.1} parent=5 // pred_check_branch
        %167 = sbr.rel (%p164) target = $region12
      $region11: #{tpu_custom_call.1} parent=5 // pred_region
        %s168 = ssub.s32 %s18, 1
        // Predicated region
        $region13: #{tpu_custom_call.1} parent=11 // pred_check
          %p169 = pneg %p65
        $region14: #{tpu_custom_call.1} parent=11 // pred_check_branch
          %171 = sbr.rel (%p169) target = $region16
        $region15: #{tpu_custom_call.1} parent=11 // pred_region
          %s173 = ssub.s32 1024, 1024
          %174 = vsyncadd [#allocation6], %s173
          %s175 = sshll.u32 [#allocation5], 4
          %s176 = int_to_ptr.vmem [resolvable:$true] %s175
          %181 = dma.hbm_to_vmem [thread:$0]  %s1, 1024, %s176, [#allocation6], 64, 64, 4
        $region16: #{tpu_custom_call.1} parent=11 // pred_fallthru
          _
        // Predicated region
        $region17: #{tpu_custom_call.1} parent=11 // pred_check
          %p182 = pneg %p86
        $region18: #{tpu_custom_call.1} parent=11 // pred_check_branch
          %184 = sbr.rel (%p182) target = $region20
        $region19: #{tpu_custom_call.1} parent=11 // pred_region
          _
        $region20: #{tpu_custom_call.1} parent=11 // pred_fallthru
          _
        // Predicated region
        $region21: #{tpu_custom_call.1} parent=11 // pred_check
          %p185 = pneg %p107
        $region22: #{tpu_custom_call.1} parent=11 // pred_check_branch
          %187 = sbr.rel (%p185) target = $region24
        $region23: #{tpu_custom_call.1} parent=11 // pred_region
          %s189 = ssub.s32 1024, 1024
          %190 = vsyncadd [#allocation6], %s189
          %s191 = sshll.u32 [#allocation7], 4
          %s192 = int_to_ptr.vmem [resolvable:$true] %s191
          %197 = dma.hbm_to_vmem [thread:$0]  %s3, 1024, %s192, [#allocation6], 64, 64, 4
        $region24: #{tpu_custom_call.1} parent=11 // pred_fallthru
          _
        // Predicated region
        $region25: #{tpu_custom_call.1} parent=11 // pred_check
          %p198 = pneg %p128
        $region26: #{tpu_custom_call.1} parent=11 // pred_check_branch
          %200 = sbr.rel (%p198) target = $region28
        $region27: #{tpu_custom_call.1} parent=11 // pred_region
          _
        $region28: #{tpu_custom_call.1} parent=11 // pred_fallthru
          _
      $region12: #{tpu_custom_call.1} parent=5 // pred_fallthru
        _
      %p201 = scmp.lt.s32.totalorder %s18, 2
      // Predicated region
      $region29: #{tpu_custom_call.1} parent=5 // pred_check
        %p202 = pneg %p201
      $region30: #{tpu_custom_call.1} parent=5 // pred_check_branch
        %204 = sbr.rel (%p202) target = $region32
      $region31: #{tpu_custom_call.1} parent=5 // pred_region
        // Predicated region
        $region33: #{tpu_custom_call.1} parent=31 // pred_check
          %p205 = pneg %p38
        $region34: #{tpu_custom_call.1} parent=31 // pred_check_branch
          %207 = sbr.rel (%p205) target = $region36
        $region35: #{tpu_custom_call.1} parent=31 // pred_region
          %s208 = sand.u32 %s28, 1
          %s209 = scalar_lea.sflag [#allocation3], %s208
          %s210 = sand.u32 %s28, 1
          %s211 = smul.addr %s210, 32
          %s212 = scalar_lea.vmem [#allocation2], %s211
          %s213 = smul.u32 4, %s18
          %s215 = ssub.s32 512, 512
          %216 = vsyncadd %s209, %s215
          %s217 = smul.addr %s213, 128
          %s218 = scalar_lea.hbm %s0, %s217
          %s219 = sshll.u32 %s212, 4
          %s220 = int_to_ptr.vmem [resolvable:$true] %s219
          %225 = dma.hbm_to_vmem [thread:$0]  %s218, 512, %s220, %s209, 128, 128, 8
        $region36: #{tpu_custom_call.1} parent=31 // pred_fallthru
          _
      $region32: #{tpu_custom_call.1} parent=5 // pred_fallthru
        _
      %p226 = scmp.le.s32.totalorder 1, %s18
      %p227 = scmp.lt.s32.totalorder %s18, 3
      %p228 = pnand %p226, %p227
      %p229 = pneg %p228
      // Predicated region
      $region37: #{tpu_custom_call.1} parent=5 // pred_check
        _
      $region38: #{tpu_custom_call.1} parent=5 // pred_check_branch
        %231 = sbr.rel (%p228) target = $region40
      $region39: #{tpu_custom_call.1} parent=5 // pred_region
        %s232 = ssub.s32 %s18, 1
        %s233 = sand.u32 %s31, 1
        %s234 = scalar_lea.sflag [#allocation3], %s233
        %s235 = sand.u32 %s31, 1
        %s236 = smul.addr %s235, 32
        %s237 = scalar_lea.vmem [#allocation2], %s236
        // Predicated region
        $region41: #{tpu_custom_call.1} parent=39 // pred_check
          %p238 = pneg %p44
        $region42: #{tpu_custom_call.1} parent=39 // pred_check_branch
          %240 = sbr.rel (%p238) target = $region44
        $region43: #{tpu_custom_call.1} parent=39 // pred_region
          %241 = dma.done %s234, 512
        $region44: #{tpu_custom_call.1} parent=39 // pred_fallthru
          _
        // Predicated region
        $region45: #{tpu_custom_call.1} parent=39 // pred_check
          %p242 = pneg %p65
        $region46: #{tpu_custom_call.1} parent=39 // pred_check_branch
          %244 = sbr.rel (%p242) target = $region48
        $region47: #{tpu_custom_call.1} parent=39 // pred_region
          %245 = dma.done [#allocation6], 1024
        $region48: #{tpu_custom_call.1} parent=39 // pred_fallthru
          _
        // Predicated region
        $region49: #{tpu_custom_call.1} parent=39 // pred_check
          %p246 = pneg %p107
        $region50: #{tpu_custom_call.1} parent=39 // pred_check_branch
          %248 = sbr.rel (%p246) target = $region52
        $region51: #{tpu_custom_call.1} parent=39 // pred_region
          %249 = dma.done [#allocation6], 1024
        $region52: #{tpu_custom_call.1} parent=39 // pred_fallthru
          _
        %s250 = sand.u32 %s31, 1
        %s251 = scalar_lea.sflag [#allocation3], %s250
        %s252 = sand.u32 %s31, 1
        %s253 = smul.addr %s252, 32
        %s254 = scalar_lea.vmem [#allocation2], %s253
        %p255 = pneg %p44
        %p256 = pneg %p41
        %p257 = pneg %p65
        %p258 = pneg %p62
        %p259 = pneg %p86
        %p260 = pneg %p83
        %p261 = pneg %p107
        %p262 = pneg %p104
        %p263 = pneg %p128
        %p264 = pneg %p125
        %p265 = pneg %p154
        %p266 = pneg %p151
        %s267 = sand.u32 %s141, 1
        %s268 = scalar_lea.sflag [#allocation4], %s267
        %s269 = sand.u32 %s141, 1
        %s270 = smul.addr %s269, 32
        %s271 = scalar_lea.vmem [#allocation8], %s270
        %s272 = smul.u32 4, %s23
        %s273 = smul.u32 4, %s23
        %v275 = vld [vmem:[%s237] sm:$0xff]
        %v276 = vld [vmem:[%s237 + $0x8] sm:$0xff]
        %v277 = vld [vmem:[%s237 + $0x10] sm:$0xff]
        %v278 = vld [vmem:[%s237 + $0x18] sm:$0xff]
        %v279 = vpack.c.bf16 %v276, %v275
        %v280 = vpack.c.bf16 %v278, %v277
        %v281 = vld [vmem:[#allocation5] sm:$0xf]
        %v282 = vld [vmem:[#allocation5 + $0x4] sm:$0xf]
        %v283 = vld [vmem:[#allocation5 + $0x8] sm:$0xf]
        %v284 = vld [vmem:[#allocation5 + $0xc] sm:$0xf]
        %v285 = vld [vmem:[#allocation5 + $0x10] sm:$0xf]
        %v286 = vld [vmem:[#allocation5 + $0x14] sm:$0xf]
        %v287 = vld [vmem:[#allocation5 + $0x18] sm:$0xf]
        %v288 = vld [vmem:[#allocation5 + $0x1c] sm:$0xf]
        %v289 = vld [vmem:[#allocation5 + $0x20] sm:$0xf]
        %v290 = vld [vmem:[#allocation5 + $0x24] sm:$0xf]
        %v291 = vld [vmem:[#allocation5 + $0x28] sm:$0xf]
        %v292 = vld [vmem:[#allocation5 + $0x2c] sm:$0xf]
        %v293 = vld [vmem:[#allocation5 + $0x30] sm:$0xf]
        %v294 = vld [vmem:[#allocation5 + $0x34] sm:$0xf]
        %v295 = vld [vmem:[#allocation5 + $0x38] sm:$0xf]
        %v296 = vld [vmem:[#allocation5 + $0x3c] sm:$0xf]
        %v297 = vld [vmem:[%s2] sm:$0x1]
        %v299 = vlaneseq
        %v300 = vshrl.u32 %v299, 7
        %v301 = vsub.s32 0, %v300
        %v302 = vrot.slane %v297, %v301
        %v320 = vunpack.c.l.b16 %v281
        %v321 = vunpack.c.l.b16 %v282
        %v322 = vunpack.c.l.b16 %v283
        %v323 = vunpack.c.l.b16 %v284
        %v324 = vunpack.c.l.b16 %v285
        %v325 = vunpack.c.l.b16 %v286
        %v326 = vunpack.c.l.b16 %v287
        %v327 = vunpack.c.l.b16 %v288
        %v328 = vunpack.c.l.b16 %v289
        %v329 = vunpack.c.l.b16 %v290
        %v330 = vunpack.c.l.b16 %v291
        %v331 = vunpack.c.l.b16 %v292
        %v332 = vunpack.c.l.b16 %v293
        %v333 = vunpack.c.l.b16 %v294
        %v334 = vunpack.c.l.b16 %v295
        %v335 = vunpack.c.l.b16 %v296
        %v336 = vpack.c.b16 %v321, %v320
        %v337 = vpack.c.b16 %v323, %v322
        %v338 = vpack.c.b16 %v325, %v324
        %v339 = vpack.c.b16 %v327, %v326
        %v340 = vpack.c.b16 %v329, %v328
        %v341 = vpack.c.b16 %v331, %v330
        %v342 = vpack.c.b16 %v333, %v332
        %v343 = vpack.c.b16 %v335, %v334
        %352 = vmatprep.subr.bf16.mxu0 0
        %353 = vmatpush1.bf16.msra.mxu0 %v343
        %354 = vmatprep.subr.bf16.mxu0 0
        %355 = vmatpush1.bf16.msra.mxu0 %v342
        %356 = vmatprep.subr.bf16.mxu0 0
        %357 = vmatpush1.bf16.msra.mxu0 %v341
        %358 = vmatprep.subr.bf16.mxu0 0
        %359 = vmatpush1.bf16.msra.mxu0 %v340
        %360 = vmatprep.subr.bf16.mxu0 0
        %361 = vmatpush1.bf16.msra.mxu0 %v339
        %362 = vmatprep.subr.bf16.mxu0 0
        %363 = vmatpush1.bf16.msra.mxu0 %v338
        %364 = vmatprep.subr.bf16.mxu0 0
        %365 = vmatpush1.bf16.msra.mxu0 %v337
        %366 = vmatprep.subr.bf16.mxu0 0
        %367 = vmatpush1.bf16.msra.mxu0 %v336
        %368 = vmatprep.subr.bf16.mxu0 0
        %369 = vmatpush2.bf16.msra.mxu0 0
        %370 = vmatprep.subr.bf16.mxu0 0
        %371 = vmatpush2.bf16.msra.mxu0 0
        %372 = vmatprep.subr.bf16.mxu0 0
        %373 = vmatpush2.bf16.msra.mxu0 0
        %374 = vmatprep.subr.bf16.mxu0 0
        %375 = vmatpush2.bf16.msra.mxu0 0
        %376 = vmatprep.subr.bf16.mxu0 0
        %377 = vmatpush2.bf16.msra.mxu0 0
        %378 = vmatprep.subr.bf16.mxu0 0
        %379 = vmatpush2.bf16.msra.mxu0 0
        %380 = vmatprep.subr.bf16.mxu0 0
        %381 = vmatpush2.bf16.msra.mxu0 0
        %382 = vmatprep.subr.bf16.mxu0 0
        %383 = vmatpush2.bf16.msra.mxu0 0
        %384 = vmatprep.mubr.bf16.mxu0 0
        %385 = vmatmul.mubr.bf16.gmra.mxu0 %v279
        %v386 = vpop.f32.mrf.mxu0
        %v387 = vadd.f32 %v302, %v386
        %v388 = vpop.f32.mrf.mxu0
        %v389 = vpop.f32.mrf.mxu0
        %v390 = vadd.f32 %v302, %v389
        %v391 = vpop.f32.mrf.mxu0
        %392 = vmatprep.mubr.bf16.mxu0 0
        %393 = vmatmul.mubr.bf16.gmra.mxu0 %v280
        %v394 = vpop.f32.mrf.mxu0
        %v395 = vadd.f32 %v302, %v394
        %v396 = vpop.f32.mrf.mxu0
        %v397 = vpop.f32.mrf.mxu0
        %v398 = vadd.f32 %v302, %v397
        %v399 = vpop.f32.mrf.mxu0
        %400 = vdwg.mxu0
        %v401 = vmax.f32 %v387, 0.0
        %v402 = vmax.f32 %v390, 0.0
        %v403 = vmax.f32 %v395, 0.0
        %v404 = vmax.f32 %v398, 0.0
        %v405 = vpack.c.bf16 %v402, %v401
        %v406 = vpack.c.bf16 %v404, %v403
        %v407 = vld [vmem:[#allocation7] sm:$0xf]
        %v408 = vld [vmem:[#allocation7 + $0x4] sm:$0xf]
        %v409 = vld [vmem:[#allocation7 + $0x8] sm:$0xf]
        %v410 = vld [vmem:[#allocation7 + $0xc] sm:$0xf]
        %v411 = vld [vmem:[#allocation7 + $0x10] sm:$0xf]
        %v412 = vld [vmem:[#allocation7 + $0x14] sm:$0xf]
        %v413 = vld [vmem:[#allocation7 + $0x18] sm:$0xf]
        %v414 = vld [vmem:[#allocation7 + $0x1c] sm:$0xf]
        %v415 = vld [vmem:[#allocation7 + $0x20] sm:$0xf]
        %v416 = vld [vmem:[#allocation7 + $0x24] sm:$0xf]
        %v417 = vld [vmem:[#allocation7 + $0x28] sm:$0xf]
        %v418 = vld [vmem:[#allocation7 + $0x2c] sm:$0xf]
        %v419 = vld [vmem:[#allocation7 + $0x30] sm:$0xf]
        %v420 = vld [vmem:[#allocation7 + $0x34] sm:$0xf]
        %v421 = vld [vmem:[#allocation7 + $0x38] sm:$0xf]
        %v422 = vld [vmem:[#allocation7 + $0x3c] sm:$0xf]
        %v423 = vld [vmem:[%s4] sm:$0x1]
        %v425 = vlaneseq
        %v426 = vshrl.u32 %v425, 7
        %v427 = vsub.s32 0, %v426
        %v428 = vrot.slane %v423, %v427
        %v446 = vunpack.c.l.b16 %v407
        %v447 = vunpack.c.l.b16 %v408
        %v448 = vunpack.c.l.b16 %v409
        %v449 = vunpack.c.l.b16 %v410
        %v450 = vunpack.c.l.b16 %v411
        %v451 = vunpack.c.l.b16 %v412
        %v452 = vunpack.c.l.b16 %v413
        %v453 = vunpack.c.l.b16 %v414
        %v454 = vunpack.c.l.b16 %v415
        %v455 = vunpack.c.l.b16 %v416
        %v456 = vunpack.c.l.b16 %v417
        %v457 = vunpack.c.l.b16 %v418
        %v458 = vunpack.c.l.b16 %v419
        %v459 = vunpack.c.l.b16 %v420
        %v460 = vunpack.c.l.b16 %v421
        %v461 = vunpack.c.l.b16 %v422
        %v462 = vpack.c.b16 %v447, %v446
        %v463 = vpack.c.b16 %v449, %v448
        %v464 = vpack.c.b16 %v451, %v450
        %v465 = vpack.c.b16 %v453, %v452
        %v466 = vpack.c.b16 %v455, %v454
        %v467 = vpack.c.b16 %v457, %v456
        %v468 = vpack.c.b16 %v459, %v458
        %v469 = vpack.c.b16 %v461, %v460
        %478 = vmatprep.subr.bf16.mxu0 0
        %479 = vmatpush1.bf16.msra.mxu0 %v469
        %480 = vmatprep.subr.bf16.mxu0 0
        %481 = vmatpush1.bf16.msra.mxu0 %v468
        %482 = vmatprep.subr.bf16.mxu0 0
        %483 = vmatpush1.bf16.msra.mxu0 %v467
        %484 = vmatprep.subr.bf16.mxu0 0
        %485 = vmatpush1.bf16.msra.mxu0 %v466
        %486 = vmatprep.subr.bf16.mxu0 0
        %487 = vmatpush1.bf16.msra.mxu0 %v465
        %488 = vmatprep.subr.bf16.mxu0 0
        %489 = vmatpush1.bf16.msra.mxu0 %v464
        %490 = vmatprep.subr.bf16.mxu0 0
        %491 = vmatpush1.bf16.msra.mxu0 %v463
        %492 = vmatprep.subr.bf16.mxu0 0
        %493 = vmatpush1.bf16.msra.mxu0 %v462
        %494 = vmatprep.subr.bf16.mxu0 0
        %495 = vmatpush2.bf16.msra.mxu0 0
        %496 = vmatprep.subr.bf16.mxu0 0
        %497 = vmatpush2.bf16.msra.mxu0 0
        %498 = vmatprep.subr.bf16.mxu0 0
        %499 = vmatpush2.bf16.msra.mxu0 0
        %500 = vmatprep.subr.bf16.mxu0 0
        %501 = vmatpush2.bf16.msra.mxu0 0
        %502 = vmatprep.subr.bf16.mxu0 0
        %503 = vmatpush2.bf16.msra.mxu0 0
        %504 = vmatprep.subr.bf16.mxu0 0
        %505 = vmatpush2.bf16.msra.mxu0 0
        %506 = vmatprep.subr.bf16.mxu0 0
        %507 = vmatpush2.bf16.msra.mxu0 0
        %508 = vmatprep.subr.bf16.mxu0 0
        %509 = vmatpush2.bf16.msra.mxu0 0
        %510 = vmatprep.mubr.bf16.mxu0 0
        %511 = vmatmul.mubr.bf16.gmra.mxu0 %v405
        %v512 = vpop.f32.mrf.mxu0
        %v513 = vadd.f32 %v428, %v512
        %v514 = vpop.f32.mrf.mxu0
        %v515 = vpop.f32.mrf.mxu0
        %v516 = vadd.f32 %v428, %v515
        %v517 = vpop.f32.mrf.mxu0
        %518 = vmatprep.mubr.bf16.mxu0 0
        %519 = vmatmul.mubr.bf16.gmra.mxu0 %v406
        %v520 = vpop.f32.mrf.mxu0
        %v521 = vadd.f32 %v428, %v520
        %v522 = vpop.f32.mrf.mxu0
        %v523 = vpop.f32.mrf.mxu0
        %v524 = vadd.f32 %v428, %v523
        %v525 = vpop.f32.mrf.mxu0
        %526 = vdwg.mxu0
        %v527 = vtanh.pop %v513
        %v528 = vtanh.pop %v516
        %v529 = vtanh.pop %v521
        %v530 = vtanh.pop %v524
        %531 = vst [vmem:[%s271] sm:$0xff] %v527
        %532 = vst [vmem:[%s271 + $0x8] sm:$0xff] %v528
        %533 = vst [vmem:[%s271 + $0x10] sm:$0xff] %v529
        %534 = vst [vmem:[%s271 + $0x18] sm:$0xff] %v530
        %s535 = sand.u32 %s141, 1
        %s536 = scalar_lea.sflag [#allocation4], %s535
        %s537 = sand.u32 %s141, 1
        %s538 = smul.addr %s537, 32
        %s539 = scalar_lea.vmem [#allocation8], %s538
        // Predicated region
        $region53: #{tpu_custom_call.1} parent=39 // pred_check
          %p540 = pneg %p151
        $region54: #{tpu_custom_call.1} parent=39 // pred_check_branch
          %542 = sbr.rel (%p540) target = $region56
        $region55: #{tpu_custom_call.1} parent=39 // pred_region
          %s543 = smul.u32 4, %s23
          %s545 = ssub.s32 512, 512
          %546 = vsyncadd %s536, %s545
          %s547 = smul.addr %s543, 128
          %s548 = scalar_lea.hbm %s5, %s547
          %s549 = sshll.u32 %s539, 4
          %s550 = int_to_ptr.vmem [resolvable:$true] %s549
          %555 = dma.vmem_to_hbm [thread:$0]  %s550, 512, %s548, %s536, 128, 128, 8
        $region56: #{tpu_custom_call.1} parent=39 // pred_fallthru
          _
      $region40: #{tpu_custom_call.1} parent=5 // pred_fallthru
        _
      %p556 = scmp.le.s32.totalorder 2, %s18
      // Predicated region
      $region57: #{tpu_custom_call.1} parent=5 // pred_check
        %p557 = pneg %p556
      $region58: #{tpu_custom_call.1} parent=5 // pred_check_branch
        %559 = sbr.rel (%p557) target = $region60
      $region59: #{tpu_custom_call.1} parent=5 // pred_region
        %s560 = ssub.s32 %s18, 2
        // Predicated region
        $region61: #{tpu_custom_call.1} parent=59 // pred_check
          %p561 = pneg %p157
        $region62: #{tpu_custom_call.1} parent=59 // pred_check_branch
          %563 = sbr.rel (%p561) target = $region64
        $region63: #{tpu_custom_call.1} parent=59 // pred_region
          %s564 = sand.u32 %s142, 1
          %s565 = scalar_lea.sflag [#allocation4], %s564
          %s566 = sand.u32 %s142, 1
          %s567 = smul.addr %s566, 32
          %s568 = scalar_lea.vmem [#allocation8], %s567
          %569 = dma.done %s565, 512
        $region64: #{tpu_custom_call.1} parent=59 // pred_fallthru
          _
      $region60: #{tpu_custom_call.1} parent=5 // pred_fallthru
        _
    $region6: #{tpu_custom_call.1} parent=1 // loop_footer
      %s22 = sadd.s32 1, %s18
    $region7: #{tpu_custom_call.1} parent=1 // loop_footer_branch
      %17 = sbr.rel target = $region3
    $region8: #{tpu_custom_call.1} parent=1 // loop_exit
      _
    %570 = vsyncpa [#allocation3], 1
    %s571 = scalar_lea.sflag [#allocation3], 1
    %572 = vsyncpa %s571, 1
    %573 = vsyncpa [#allocation6], 1
    %574 = vsyncpa [#allocation4], 1
    %s575 = scalar_lea.sflag [#allocation4], 1
    %576 = vsyncpa %s575, 1

</llo_original>
